<compile_context>
chip_gen: v7x
topology: tpu7x:2x2x1
jax: 0.10.0
libtpu: 0.0.40
codegen_flags: <defaults>
</compile_context>

<pallas_src>
import functools

import jax
import jax.numpy as jnp
from jax import lax
from jax.experimental import pallas as pl
from jax.experimental.pallas import tpu as pltpu


def _round_up(x, m):
    return ((x + m - 1) // m) * m


def _pick_chunk(seq_len, target):
    """Largest divisor of seq_len that is <= target (always >= 1)."""
    t = min(seq_len, max(1, target))
    while seq_len % t:
        t -= 1
    return t


def rnn_kernel(x_ref, wih_ref, whh_ref, b_ref, wfc_ref, bfc_ref, o_ref,
               h_ref, xp_ref, *, chunk, batch):
    """One time-chunk of the RNN forward.

    Grid axis 0 iterates over time chunks (serial dependency through h_ref).

    x_ref:   (T*Bp, Ep)  bf16  current chunk of the embedded sequence
    wih_ref: (Ep, Hp)    bf16  input->hidden weight (pre-transposed, padded)
    whh_ref: (Hp, Hp)    bf16  hidden->hidden weight (pre-transposed, padded)
    b_ref:   (1, Hp)     f32   combined bias  b_ih + b_hh (padded)
    wfc_ref: (Hp, Op)    bf16  fc weight (pre-transposed, padded)
    bfc_ref: (1, Op)     f32   fc bias (padded)
    o_ref:   (Bp, Op)    f32   output = fc(final hidden); written on last chunk
    h_ref:   (Bp, Hp)    f32   persistent hidden-state carry (scratch)
    xp_ref:  (T*Bp, Hp)  f32   per-chunk hoisted input projection (scratch)
    """
    step_idx = pl.program_id(0)

    @pl.when(step_idx == 0)
    def _():
        h_ref[...] = jnp.zeros_like(h_ref)

    # Hoisted input projection for the whole chunk: one MXU matmul (bf16 in,
    # f32 accumulation) off the serial critical chain.
    xp_ref[...] = (
        jnp.dot(x_ref[...], wih_ref[...], preferred_element_type=jnp.float32)
        + b_ref[...]
    )

    whh = whh_ref[...]                       # loop-invariant, loaded once
    # TODO(synk): stage W_hh on the MXU once via pltpu.matmul_push_rhs /
    # matmul_acc_lhs / matmul_pop to drop the per-step weight push from the
    # serial MXU->VPU->EUP chain (and use MRB in-place accumulate on v7x).

    def step(t, h):
        start = pl.multiple_of(t * batch, batch)
        x_t = xp_ref[pl.ds(start, batch), :]             # (Bp, Hp) f32
        hv = jnp.dot(h.astype(whh.dtype), whh,
                     preferred_element_type=jnp.float32)
        return jnp.tanh(x_t + hv)                        # carry stays f32

    # chunk is small and static -> bounded unroll keeps LLO visibility without
    # blowing up the instruction footprint at production seq_len.
    h_ref[...] = lax.fori_loop(0, chunk, step, h_ref[...], unroll=True)

    @pl.when(step_idx == pl.num_programs(0) - 1)
    def _():
        h_last = h_ref[...].astype(wfc_ref.dtype)
        o_ref[...] = (
            jnp.dot(h_last, wfc_ref[...], preferred_element_type=jnp.float32)
            + bfc_ref[...]
        ).astype(o_ref.dtype)


def rnn_forward(text, params, *, time_chunk=4):
    """text: [seq_len, batch] int32 token ids. Returns [batch, output_dim] float32."""
    emb_table = params["embedding"]          # (vocab, E)
    w_ih = params["w_ih"]                    # (H, E)  PyTorch layout
    w_hh = params["w_hh"]                    # (H, H)
    b_ih = params["b_ih"]                    # (H,)
    b_hh = params["b_hh"]                    # (H,)
    w_fc = params["w_fc"]                    # (O, H)
    b_fc = params["b_fc"]                    # (O,)

    # Glue: embedding lookup (data-dependent gather) in plain JAX.
    embedded = emb_table[text]               # (S, B, E) float32
    S, B, E = embedded.shape
    H = w_hh.shape[0]
    O = w_fc.shape[0]

    # Lane-dense padding: feature dims -> multiples of 128; batch -> multiple
    # of 8 (f32 sublane).  Zero-padded weights/biases + tanh(0)=0 keep the
    # padded hidden lanes identically zero, so padding is numerically inert.
    Ep, Hp, Op = (_round_up(d, 128) for d in (E, H, O))
    Bp = _round_up(B, 8)
    # TODO(synk): at production batch sizes, pad Bp toward the MXU width
    # (128 rows on v5e, 256 on v6e/v7x) and on v7x shard the batch across the
    # two TensorCores with a leading "parallel" grid axis.

    emb_p = jnp.pad(embedded, ((0, 0), (0, Bp - B), (0, Ep - E)))
    x_flat = emb_p.reshape(S * Bp, Ep).astype(jnp.bfloat16)   # time-major flatten

    wih_t = jnp.pad(w_ih.T, ((0, Ep - E), (0, Hp - H))).astype(jnp.bfloat16)
    whh_t = jnp.pad(w_hh.T, ((0, Hp - H), (0, Hp - H))).astype(jnp.bfloat16)
    bias = jnp.pad(b_ih + b_hh, ((0, Hp - H),)).reshape(1, Hp)          # f32
    wfc_t = jnp.pad(w_fc.T, ((0, Hp - H), (0, Op - O))).astype(jnp.bfloat16)
    bfc = jnp.pad(b_fc, ((0, Op - O),)).reshape(1, Op)                  # f32

    T = _pick_chunk(S, time_chunk)           # timesteps per grid step
    n_chunks = S // T

    kernel = functools.partial(rnn_kernel, chunk=T, batch=Bp)

    # Explicit VMEM budget: double-buffered x chunks + scratches + weights.
    vmem_est = (
        2 * T * Bp * Ep * 2                    # x chunk (bf16, double-buffered)
        + T * Bp * Hp * 4                      # xp scratch (f32)
        + Bp * Hp * 4                          # h scratch (f32)
        + (Ep * Hp + Hp * Hp + Hp * Op) * 2 * 2  # weights (bf16, 2 buffers)
        + (Hp + Op) * 4 * 2                    # biases (f32)
        + 2 * Bp * Op * 4                      # output (f32)
    )
    vmem_limit = int(min(64 * 1024 * 1024, max(16 * 1024 * 1024, 2 * vmem_est)))

    cost = pl.CostEstimate(
        flops=int(2 * S * Bp * (Ep * Hp + Hp * Hp) + 2 * Bp * Hp * Op),
        transcendentals=int(S * Bp * Hp),
        bytes_accessed=int(
            x_flat.size * 2
            + (wih_t.size + whh_t.size + wfc_t.size) * 2
            + (bias.size + bfc.size) * 4
            + Bp * Op * 4
        ),
    )

    out_p = pl.pallas_call(
        kernel,
        out_shape=jax.ShapeDtypeStruct((Bp, Op), jnp.float32),
        grid_spec=pltpu.PrefetchScalarGridSpec(
            num_scalar_prefetch=0,
            grid=(n_chunks,),
            in_specs=[
                pl.BlockSpec((T * Bp, Ep), lambda i: (i, 0)),   # streamed chunks
                pl.BlockSpec((Ep, Hp), lambda i: (0, 0)),       # loop-invariant
                pl.BlockSpec((Hp, Hp), lambda i: (0, 0)),
                pl.BlockSpec((1, Hp), lambda i: (0, 0)),
                pl.BlockSpec((Hp, Op), lambda i: (0, 0)),
                pl.BlockSpec((1, Op), lambda i: (0, 0)),
            ],
            out_specs=pl.BlockSpec((Bp, Op), lambda i: (0, 0)),
            scratch_shapes=[
                pltpu.VMEM((Bp, Hp), jnp.float32),       # persistent hidden state
                pltpu.VMEM((T * Bp, Hp), jnp.float32),   # per-chunk input proj
            ],
        ),
        compiler_params=pltpu.CompilerParams(
            dimension_semantics=("arbitrary",),
            vmem_limit_bytes=vmem_limit,
        ),
        cost_estimate=cost,
    )(x_flat, wih_t, whh_t, bias, wfc_t, bfc)

    return out_p[:B, :O]


def rnn_forward_ref(text, params):
    """Pure-JAX f32 reference matching PyTorch nn.RNN(tanh) + Linear semantics."""
    embedded = params["embedding"][text]     # (S, B, E)
    w_ih, w_hh = params["w_ih"], params["w_hh"]
    b_ih, b_hh = params["b_ih"], params["b_hh"]
    B = embedded.shape[1]
    H = w_hh.shape[0]

    def step(h, x_t):
        h_new = jnp.tanh(x_t @ w_ih.T + b_ih + h @ w_hh.T + b_hh)
        return h_new, None

    h0 = jnp.zeros((B, H), jnp.float32)
    h_last, _ = lax.scan(step, h0, embedded)
    return h_last @ params["w_fc"].T + params["b_fc"]


def init_params(key, vocab, emb_dim, hidden_dim, out_dim):
    ks = jax.random.split(key, 7)
    scale = 0.1
    return {
        "embedding": scale * jax.random.normal(ks[0], (vocab, emb_dim), jnp.float32),
        "w_ih": scale * jax.random.normal(ks[1], (hidden_dim, emb_dim), jnp.float32),
        "w_hh": scale * jax.random.normal(ks[2], (hidden_dim, hidden_dim), jnp.float32),
        "b_ih": scale * jax.random.normal(ks[3], (hidden_dim,), jnp.float32),
        "b_hh": scale * jax.random.normal(ks[4], (hidden_dim,), jnp.float32),
        "w_fc": scale * jax.random.normal(ks[5], (out_dim, hidden_dim), jnp.float32),
        "b_fc": scale * jax.random.normal(ks[6], (out_dim,), jnp.float32),
    }


if __name__ == "__main__":
    key = jax.random.PRNGKey(0)
    vocab, emb_dim, hidden_dim, out_dim = 50, 32, 32, 16
    seq_len, batch = 8, 8

    k_tok, k_par = jax.random.split(key)
    text = jax.random.randint(k_tok, (seq_len, batch), 0, vocab, dtype=jnp.int32)
    params = init_params(k_par, vocab, emb_dim, hidden_dim, out_dim)

    out = jax.block_until_ready(rnn_forward(text, params))
    ref = jax.block_until_ready(rnn_forward_ref(text, params))

    assert out.shape == (batch, out_dim)
    # bf16 MXU operands (f32 accumulation / f32 carry) -> relaxed tolerance
    # vs. the all-f32 reference.
    assert jnp.allclose(out, ref, atol=2e-2, rtol=2e-2)
    print("KERNEL_OK")
</pallas_src>

<mosaic_0001>
module attributes {stable_mosaic.version = 11 : i64} {
  func.func @rnn_kernel(%arg0: i32, %arg1: memref<32x128xbf16, #tpu.memory_space<vmem>>, %arg2: memref<128x128xbf16, #tpu.memory_space<vmem>>, %arg3: memref<128x128xbf16, #tpu.memory_space<vmem>>, %arg4: memref<1x128xf32, #tpu.memory_space<vmem>>, %arg5: memref<128x128xbf16, #tpu.memory_space<vmem>>, %arg6: memref<1x128xf32, #tpu.memory_space<vmem>>, %arg7: memref<8x128xf32, #tpu.memory_space<vmem>>, %arg8: memref<8x128xf32, #tpu.memory_space<vmem>>, %arg9: memref<32x128xf32, #tpu.memory_space<vmem>>) attributes {dimension_semantics = [#tpu.dimension_semantics<arbitrary>], iteration_bounds = array<i64: 2>, scalar_prefetch = 0 : i64, scratch_operands = 2 : i64, tpu.core_type = #tpu.core_type<tc>, window_params = [{transform_indices = @transform_0, window_bounds = array<i64: 32, 128>}, {pipeline_mode = #tpu.pipeline_mode<synchronous>, transform_indices = @transform_1, window_bounds = array<i64: 128, 128>}, {pipeline_mode = #tpu.pipeline_mode<synchronous>, transform_indices = @transform_2, window_bounds = array<i64: 128, 128>}, {pipeline_mode = #tpu.pipeline_mode<synchronous>, transform_indices = @transform_3, window_bounds = array<i64: 1, 128>}, {pipeline_mode = #tpu.pipeline_mode<synchronous>, transform_indices = @transform_4, window_bounds = array<i64: 128, 128>}, {pipeline_mode = #tpu.pipeline_mode<synchronous>, transform_indices = @transform_5, window_bounds = array<i64: 1, 128>}, {pipeline_mode = #tpu.pipeline_mode<synchronous>, transform_indices = @transform_6, window_bounds = array<i64: 8, 128>}]} {
    %c0_i32 = arith.constant 0 : i32
    %0 = arith.cmpi eq, %arg0, %c0_i32 : i32
    %1 = arith.extui %0 : i1 to i32
    %c0_i32_0 = arith.constant 0 : i32
    %2 = arith.cmpi ne, %1, %c0_i32_0 : i32
    scf.if %2 {
      %cst_28 = arith.constant 0.000000e+00 : f32
      %48 = vector.broadcast %cst_28 : f32 to vector<8x128xf32>
      %c0_29 = arith.constant 0 : index
      %c0_30 = arith.constant 0 : index
      %49 = vector.load %arg8[%c0_29, %c0_30] : memref<8x128xf32, #tpu.memory_space<vmem>>, vector<8x128xf32>
      tpu.vector_store %arg8[%c0_29, %c0_30], %48 {strides = array<i32>} : memref<8x128xf32, #tpu.memory_space<vmem>>, vector<8x128xf32>,
    } else {
    }
    %c0 = arith.constant 0 : index
    %c0_1 = arith.constant 0 : index
    %3 = vector.load %arg1[%c0, %c0_1] : memref<32x128xbf16, #tpu.memory_space<vmem>>, vector<32x128xbf16>
    %c0_2 = arith.constant 0 : index
    %c0_3 = arith.constant 0 : index
    %4 = vector.load %arg2[%c0_2, %c0_3] : memref<128x128xbf16, #tpu.memory_space<vmem>>, vector<128x128xbf16>
    %cst = arith.constant dense<0.000000e+00> : vector<32x128xf32>
    %5 = tpu.matmul %3, %4, %cst {dimension_numbers = #tpu.dot_dimension_numbers<[1], [0], [0], [1], [0, 0, 1, 1], [], []>} : vector<32x128xbf16>, vector<128x128xbf16>, vector<32x128xf32> -> vector<32x128xf32>
    %c0_4 = arith.constant 0 : index
    %c0_5 = arith.constant 0 : index
    %6 = vector.load %arg4[%c0_4, %c0_5] : memref<1x128xf32, #tpu.memory_space<vmem>>, vector<1x128xf32>
    %7 = vector.broadcast %6 : vector<1x128xf32> to vector<32x128xf32>
    %8 = arith.addf %5, %7 : vector<32x128xf32>
    %c0_6 = arith.constant 0 : index
    %c0_7 = arith.constant 0 : index
    %9 = vector.load %arg9[%c0_6, %c0_7] : memref<32x128xf32, #tpu.memory_space<vmem>>, vector<32x128xf32>
    tpu.vector_store %arg9[%c0_6, %c0_7], %8 {strides = array<i32>} : memref<32x128xf32, #tpu.memory_space<vmem>>, vector<32x128xf32>,
    %c0_8 = arith.constant 0 : index
    %c0_9 = arith.constant 0 : index
    %10 = vector.load %arg3[%c0_8, %c0_9] : memref<128x128xbf16, #tpu.memory_space<vmem>>, vector<128x128xbf16>
    %c0_10 = arith.constant 0 : index
    %c0_11 = arith.constant 0 : index
    %11 = vector.load %arg8[%c0_10, %c0_11] : memref<8x128xf32, #tpu.memory_space<vmem>>, vector<8x128xf32>
    %c0_i32_12 = arith.constant 0 : i32
    %c8_i32 = arith.constant 8 : i32
    %12 = arith.muli %c0_i32_12, %c8_i32 : i32
    %13 = tpu.assume_multiple %12, 8 : i32
    %14 = arith.index_cast %13 : i32 to index
    %c0_13 = arith.constant 0 : index
    %15 = vector.load %arg9[%14, %c0_13] : memref<32x128xf32, #tpu.memory_space<vmem>>, vector<8x128xf32>
    %16 = arith.truncf %11 : vector<8x128xf32> to vector<8x128xbf16>
    %cst_14 = arith.constant dense<0.000000e+00> : vector<8x128xf32>
    %17 = tpu.matmul %16, %10, %cst_14 {dimension_numbers = #tpu.dot_dimension_numbers<[1], [0], [0], [1], [0, 0, 1, 1], [], []>} : vector<8x128xbf16>, vector<128x128xbf16>, vector<8x128xf32> -> vector<8x128xf32>
    %18 = arith.addf %15, %17 : vector<8x128xf32>
    %19 = math.tanh %18 : vector<8x128xf32>
    %c1_i32 = arith.constant 1 : i32
    %c8_i32_15 = arith.constant 8 : i32
    %20 = arith.muli %c1_i32, %c8_i32_15 : i32
    %21 = tpu.assume_multiple %20, 8 : i32
    %22 = arith.index_cast %21 : i32 to index
    %c0_16 = arith.constant 0 : index
    %23 = vector.load %arg9[%22, %c0_16] : memref<32x128xf32, #tpu.memory_space<vmem>>, vector<8x128xf32>
    %24 = arith.truncf %19 : vector<8x128xf32> to vector<8x128xbf16>
    %cst_17 = arith.constant dense<0.000000e+00> : vector<8x128xf32>
    %25 = tpu.matmul %24, %10, %cst_17 {dimension_numbers = #tpu.dot_dimension_numbers<[1], [0], [0], [1], [0, 0, 1, 1], [], []>} : vector<8x128xbf16>, vector<128x128xbf16>, vector<8x128xf32> -> vector<8x128xf32>
    %26 = arith.addf %23, %25 : vector<8x128xf32>
    %27 = math.tanh %26 : vector<8x128xf32>
    %c2_i32 = arith.constant 2 : i32
    %c8_i32_18 = arith.constant 8 : i32
    %28 = arith.muli %c2_i32, %c8_i32_18 : i32
    %29 = tpu.assume_multiple %28, 8 : i32
    %30 = arith.index_cast %29 : i32 to index
    %c0_19 = arith.constant 0 : index
    %31 = vector.load %arg9[%30, %c0_19] : memref<32x128xf32, #tpu.memory_space<vmem>>, vector<8x128xf32>
    %32 = arith.truncf %27 : vector<8x128xf32> to vector<8x128xbf16>
    %cst_20 = arith.constant dense<0.000000e+00> : vector<8x128xf32>
    %33 = tpu.matmul %32, %10, %cst_20 {dimension_numbers = #tpu.dot_dimension_numbers<[1], [0], [0], [1], [0, 0, 1, 1], [], []>} : vector<8x128xbf16>, vector<128x128xbf16>, vector<8x128xf32> -> vector<8x128xf32>
    %34 = arith.addf %31, %33 : vector<8x128xf32>
    %35 = math.tanh %34 : vector<8x128xf32>
    %c3_i32 = arith.constant 3 : i32
    %c8_i32_21 = arith.constant 8 : i32
    %36 = arith.muli %c3_i32, %c8_i32_21 : i32
    %37 = tpu.assume_multiple %36, 8 : i32
    %38 = arith.index_cast %37 : i32 to index
    %c0_22 = arith.constant 0 : index
    %39 = vector.load %arg9[%38, %c0_22] : memref<32x128xf32, #tpu.memory_space<vmem>>, vector<8x128xf32>
    %40 = arith.truncf %35 : vector<8x128xf32> to vector<8x128xbf16>
    %cst_23 = arith.constant dense<0.000000e+00> : vector<8x128xf32>
    %41 = tpu.matmul %40, %10, %cst_23 {dimension_numbers = #tpu.dot_dimension_numbers<[1], [0], [0], [1], [0, 0, 1, 1], [], []>} : vector<8x128xbf16>, vector<128x128xbf16>, vector<8x128xf32> -> vector<8x128xf32>
    %42 = arith.addf %39, %41 : vector<8x128xf32>
    %43 = math.tanh %42 : vector<8x128xf32>
    %c4_i32 = arith.constant 4 : i32
    %c0_24 = arith.constant 0 : index
    %c0_25 = arith.constant 0 : index
    %44 = vector.load %arg8[%c0_24, %c0_25] : memref<8x128xf32, #tpu.memory_space<vmem>>, vector<8x128xf32>
    tpu.vector_store %arg8[%c0_24, %c0_25], %43 {strides = array<i32>} : memref<8x128xf32, #tpu.memory_space<vmem>>, vector<8x128xf32>,
    %c1_i32_26 = arith.constant 1 : i32
    %45 = arith.cmpi eq, %arg0, %c1_i32_26 : i32
    %46 = arith.extui %45 : i1 to i32
    %c0_i32_27 = arith.constant 0 : i32
    %47 = arith.cmpi ne, %46, %c0_i32_27 : i32
    scf.if %47 {
      %c0_28 = arith.constant 0 : index
      %c0_29 = arith.constant 0 : index
      %48 = vector.load %arg8[%c0_28, %c0_29] : memref<8x128xf32, #tpu.memory_space<vmem>>, vector<8x128xf32>
      %49 = arith.truncf %48 : vector<8x128xf32> to vector<8x128xbf16>
      %c0_30 = arith.constant 0 : index
      %c0_31 = arith.constant 0 : index
      %50 = vector.load %arg5[%c0_30, %c0_31] : memref<128x128xbf16, #tpu.memory_space<vmem>>, vector<128x128xbf16>
      %cst_32 = arith.constant dense<0.000000e+00> : vector<8x128xf32>
      %51 = tpu.matmul %49, %50, %cst_32 {dimension_numbers = #tpu.dot_dimension_numbers<[1], [0], [0], [1], [0, 0, 1, 1], [], []>} : vector<8x128xbf16>, vector<128x128xbf16>, vector<8x128xf32> -> vector<8x128xf32>
      %c0_33 = arith.constant 0 : index
      %c0_34 = arith.constant 0 : index
      %52 = vector.load %arg6[%c0_33, %c0_34] : memref<1x128xf32, #tpu.memory_space<vmem>>, vector<1x128xf32>
      %53 = vector.broadcast %52 : vector<1x128xf32> to vector<8x128xf32>
      %54 = arith.addf %51, %53 : vector<8x128xf32>
      %c0_35 = arith.constant 0 : index
      %c0_36 = arith.constant 0 : index
      %55 = vector.load %arg7[%c0_35, %c0_36] : memref<8x128xf32, #tpu.memory_space<vmem>>, vector<8x128xf32>
      tpu.vector_store %arg7[%c0_35, %c0_36], %54 {strides = array<i32>} : memref<8x128xf32, #tpu.memory_space<vmem>>, vector<8x128xf32>,
    } else {
    }
    return
  }
  func.func @transform_0(%arg0: i32) -> (i32, i32) {
    %c0_i32 = arith.constant 0 : i32
    %c0_i32_0 = arith.constant 0 : i32
    return %arg0, %c0_i32 : i32, i32
  }
  func.func @transform_1(%arg0: i32) -> (i32, i32) {
    %c0_i32 = arith.constant 0 : i32
    %c0_i32_0 = arith.constant 0 : i32
    %c0_i32_1 = arith.constant 0 : i32
    return %c0_i32, %c0_i32_0 : i32, i32
  }
  func.func @transform_2(%arg0: i32) -> (i32, i32) {
    %c0_i32 = arith.constant 0 : i32
    %c0_i32_0 = arith.constant 0 : i32
    %c0_i32_1 = arith.constant 0 : i32
    return %c0_i32, %c0_i32_0 : i32, i32
  }
  func.func @transform_3(%arg0: i32) -> (i32, i32) {
    %c0_i32 = arith.constant 0 : i32
    %c0_i32_0 = arith.constant 0 : i32
    %c0_i32_1 = arith.constant 0 : i32
    return %c0_i32, %c0_i32_0 : i32, i32
  }
  func.func @transform_4(%arg0: i32) -> (i32, i32) {
    %c0_i32 = arith.constant 0 : i32
    %c0_i32_0 = arith.constant 0 : i32
    %c0_i32_1 = arith.constant 0 : i32
    return %c0_i32, %c0_i32_0 : i32, i32
  }
  func.func @transform_5(%arg0: i32) -> (i32, i32) {
    %c0_i32 = arith.constant 0 : i32
    %c0_i32_0 = arith.constant 0 : i32
    %c0_i32_1 = arith.constant 0 : i32
    return %c0_i32, %c0_i32_0 : i32, i32
  }
  func.func @transform_6(%arg0: i32) -> (i32, i32) {
    %c0_i32 = arith.constant 0 : i32
    %c0_i32_0 = arith.constant 0 : i32
    %c0_i32_1 = arith.constant 0 : i32
    return %c0_i32, %c0_i32_0 : i32, i32
  }
}

</mosaic_0001>

<llo_original>
// kernel: tpu_custom_call.1
$region0: #{tpu_custom_call.1}
  #allocation0 [shape = 'u32[]', space=smem, size = 0x4, offset = 0x4, fixed_abs, tag = 'smem constant byte address 0x4 - core index']
  #allocation1 [shape = 'u32[144,128]{1,0:T(1,128)}', space=vmem, size = 0x12000, scoped, tag = 'internal scratch']
  #allocation2 [shape = 'f32[8,128]{1,0:T(8,128)}', space=vmem, size = 0x1000, scoped, tag = 'scratch operand']
  #allocation3 [shape = 'f32[32,128]{1,0:T(8,128)}', space=vmem, size = 0x4000, scoped, tag = 'scratch operand']
  %s0 = inlined_call_operand.hbm [shape: bf16[64,128], index: 0, kind: input, shape index: {}]
  %s1 = inlined_call_operand.hbm [shape: bf16[128,128], index: 1, kind: input, shape index: {}]
  %s2 = inlined_call_operand.hbm [shape: bf16[128,128], index: 2, kind: input, shape index: {}]
  %s3 = inlined_call_operand.vmem [shape: f32[1,128], index: 3, kind: input, shape index: {}]
  %s4 = inlined_call_operand.hbm [shape: bf16[128,128], index: 4, kind: input, shape index: {}]
  %s5 = inlined_call_operand.vmem [shape: f32[1,128], index: 5, kind: input, shape index: {}]
  %s6 = inlined_call_operand.hbm [shape: f32[8,128], index: 6, kind: output, shape index: {}]
  %s7 = sld [smem:[#allocation0]]
  $region81: #{tpu_custom_call.1} parent=0
    _
  %s9 = ssub.s32 1, %s7
  %s10 = scalar_select 0, %s9, %s7
  $region1: #{tpu_custom_call.1} parent=0
    #allocation4 [shape = 'u8[16384]{0}', space=vmem, size = 0x4000, scoped, tag = 'input window, operand 0']
    #allocation5 [shape = 's32[2]{0}', space=sflag, size = 0x8, scoped, tag = 'scoped memory for tpu_custom_call.1']
    #allocation6 [shape = 's32[2]{0}', space=sflag, size = 0x8, scoped, tag = 'scoped memory for tpu_custom_call.1']
    #allocation7 [shape = 'u8[32768]{0}', space=vmem, size = 0x8000, scoped, tag = 'input window, operand 1, single buffered']
    #allocation8 [shape = 's32[1]{0}', space=sflag, size = 0x4, scoped, tag = 'scoped memory for tpu_custom_call.1']
    #allocation9 [shape = 'u8[32768]{0}', space=vmem, size = 0x8000, scoped, tag = 'input window, operand 2, single buffered']
    #allocation10 [shape = 'u8[32768]{0}', space=vmem, size = 0x8000, scoped, tag = 'input window, operand 4, single buffered']
    #allocation11 [shape = 's32[1]{0}', space=sflag, size = 0x4, scoped, tag = 'scoped memory for tpu_custom_call.1']
    #allocation12 [shape = 'u8[4096]{0}', space=vmem, size = 0x1000, scoped, tag = 'output window, operand 0, single buffered']
    %11 = vsyncpa [#allocation5], 0
    %s12 = scalar_lea.sflag [#allocation5], 1
    %13 = vsyncpa %s12, 0
    %14 = vsyncpa [#allocation8], 0
    %15 = vsyncpa [#allocation11], 0
    %16 = vsyncpa [#allocation6], 0
    loop: start=0, step=1, limit=4
    $region2: #{tpu_custom_call.1} parent=1 // loop_pre_header
      _
    $region3: #{tpu_custom_call.1} parent=1 // loop_header
      %s18 = sphi 0, %s22
      %p19 = scmp.ge.s32.totalorder %s18, 4
      %s28 = sphi 0, %s30
      %s31 = sphi 0, %s28
      %s32 = sphi 0, %s31
      %s48 = sphi 0, %s32
      %s52 = sphi 0, %s52
      %s54 = sphi 0, %s52
      %s55 = sphi 0, %s54
      %s69 = sphi 0, %s55
      %s73 = sphi 0, %s73
      %s75 = sphi 0, %s73
      %s76 = sphi 0, %s75
      %s90 = sphi 0, %s76
      %s94 = sphi 0, %s94
      %s96 = sphi 0, %s94
      %s97 = sphi 0, %s96
      %s111 = sphi 0, %s97
      %s115 = sphi 0, %s115
      %s117 = sphi 0, %s115
      %s118 = sphi 0, %s117
      %s132 = sphi 0, %s118
      %s136 = sphi 0, %s136
      %s138 = sphi 0, %s136
      %s139 = sphi 0, %s138
      %s153 = sphi 0, %s139
      %s157 = sphi 0, %s157
      %s159 = sphi 0, %s157
      %s160 = sphi 0, %s159
      %s174 = sphi 0, %s160
    $region4: #{tpu_custom_call.1} parent=1 // loop_header_branch
      %21 = sbr.rel (%p19) target = $region8
    $region5: #{tpu_custom_call.1} parent=1 // loop_body
      %s23 = ssub.s32 %s18, 1
      %s24 = ssub.s32 %s18, 2
      %s25 = sadd.s32 %s18, 1
      %s26 = ssub.s32 %s18, %s25
      %p27 = scmp.eq.s32.totalorder %s26, 0
      %s29 = sadd.s32 %s28, 1
      %s30 = scalar_select %p27, %s28, %s29
      %p33 = pneg %p27
      %p34 = scmp.eq.s32.totalorder %s18, 1
      %p35 = por %p33, %p34
      %p36 = scmp.ne.s32.totalorder %s28, %s31
      %p37 = scmp.eq.s32.totalorder %s18, 0
      %p38 = por %p36, %p37
      %p39 = scmp.ne.s32.totalorder %s28, %s31
      %p40 = scmp.eq.s32.totalorder %s23, 1
      %p41 = por %p39, %p40
      %p42 = scmp.ne.s32.totalorder %s31, %s32
      %p43 = scmp.eq.s32.totalorder %s23, 0
      %p44 = por %p42, %p43
      %p45 = scmp.ne.s32.totalorder %s31, %s32
      %p46 = scmp.eq.s32.totalorder %s24, 1
      %p47 = por %p45, %p46
      %p49 = scmp.ne.s32.totalorder %s32, %s48
      %p50 = scmp.eq.s32.totalorder %s24, 0
      %p51 = por %p49, %p50
      %s53 = sadd.s32 %s52, 1
      %p56 = scmp.eq.s32.totalorder %s18, 1
      %p57 = scmp.ne.s32.totalorder %s52, %s54
      %p58 = scmp.eq.s32.totalorder %s18, 0
      %p59 = por %p57, %p58
      %p60 = scmp.ne.s32.totalorder %s52, %s54
      %p61 = scmp.eq.s32.totalorder %s23, 1
      %p62 = por %p60, %p61
      %p63 = scmp.ne.s32.totalorder %s54, %s55
      %p64 = scmp.eq.s32.totalorder %s23, 0
      %p65 = por %p63, %p64
      %p66 = scmp.ne.s32.totalorder %s54, %s55
      %p67 = scmp.eq.s32.totalorder %s24, 1
      %p68 = por %p66, %p67
      %p70 = scmp.ne.s32.totalorder %s55, %s69
      %p71 = scmp.eq.s32.totalorder %s24, 0
      %p72 = por %p70, %p71
      %s74 = sadd.s32 %s73, 1
      %p77 = scmp.eq.s32.totalorder %s18, 1
      %p78 = scmp.ne.s32.totalorder %s73, %s75
      %p79 = scmp.eq.s32.totalorder %s18, 0
      %p80 = por %p78, %p79
      %p81 = scmp.ne.s32.totalorder %s73, %s75
      %p82 = scmp.eq.s32.totalorder %s23, 1
      %p83 = por %p81, %p82
      %p84 = scmp.ne.s32.totalorder %s75, %s76
      %p85 = scmp.eq.s32.totalorder %s23, 0
      %p86 = por %p84, %p85
      %p87 = scmp.ne.s32.totalorder %s75, %s76
      %p88 = scmp.eq.s32.totalorder %s24, 1
      %p89 = por %p87, %p88
      %p91 = scmp.ne.s32.totalorder %s76, %s90
      %p92 = scmp.eq.s32.totalorder %s24, 0
      %p93 = por %p91, %p92
      %s95 = sadd.s32 %s94, 1
      %p98 = scmp.eq.s32.totalorder %s18, 1
      %p99 = scmp.ne.s32.totalorder %s94, %s96
      %p100 = scmp.eq.s32.totalorder %s18, 0
      %p101 = por %p99, %p100
      %p102 = scmp.ne.s32.totalorder %s94, %s96
      %p103 = scmp.eq.s32.totalorder %s23, 1
      %p104 = por %p102, %p103
      %p105 = scmp.ne.s32.totalorder %s96, %s97
      %p106 = scmp.eq.s32.totalorder %s23, 0
      %p107 = por %p105, %p106
      %p108 = scmp.ne.s32.totalorder %s96, %s97
      %p109 = scmp.eq.s32.totalorder %s24, 1
      %p110 = por %p108, %p109
      %p112 = scmp.ne.s32.totalorder %s97, %s111
      %p113 = scmp.eq.s32.totalorder %s24, 0
      %p114 = por %p112, %p113
      %s116 = sadd.s32 %s115, 1
      %p119 = scmp.eq.s32.totalorder %s18, 1
      %p120 = scmp.ne.s32.totalorder %s115, %s117
      %p121 = scmp.eq.s32.totalorder %s18, 0
      %p122 = por %p120, %p121
      %p123 = scmp.ne.s32.totalorder %s115, %s117
      %p124 = scmp.eq.s32.totalorder %s23, 1
      %p125 = por %p123, %p124
      %p126 = scmp.ne.s32.totalorder %s117, %s118
      %p127 = scmp.eq.s32.totalorder %s23, 0
      %p128 = por %p126, %p127
      %p129 = scmp.ne.s32.totalorder %s117, %s118
      %p130 = scmp.eq.s32.totalorder %s24, 1
      %p131 = por %p129, %p130
      %p133 = scmp.ne.s32.totalorder %s118, %s132
      %p134 = scmp.eq.s32.totalorder %s24, 0
      %p135 = por %p133, %p134
      %s137 = sadd.s32 %s136, 1
      %p140 = scmp.eq.s32.totalorder %s18, 1
      %p141 = scmp.ne.s32.totalorder %s136, %s138
      %p142 = scmp.eq.s32.totalorder %s18, 0
      %p143 = por %p141, %p142
      %p144 = scmp.ne.s32.totalorder %s136, %s138
      %p145 = scmp.eq.s32.totalorder %s23, 1
      %p146 = por %p144, %p145
      %p147 = scmp.ne.s32.totalorder %s138, %s139
      %p148 = scmp.eq.s32.totalorder %s23, 0
      %p149 = por %p147, %p148
      %p150 = scmp.ne.s32.totalorder %s138, %s139
      %p151 = scmp.eq.s32.totalorder %s24, 1
      %p152 = por %p150, %p151
      %p154 = scmp.ne.s32.totalorder %s139, %s153
      %p155 = scmp.eq.s32.totalorder %s24, 0
      %p156 = por %p154, %p155
      %s158 = sadd.s32 %s157, 1
      %p161 = scmp.eq.s32.totalorder %s18, 1
      %p162 = scmp.ne.s32.totalorder %s157, %s159
      %p163 = scmp.eq.s32.totalorder %s18, 0
      %p164 = por %p162, %p163
      %p165 = scmp.ne.s32.totalorder %s157, %s159
      %p166 = scmp.eq.s32.totalorder %s23, 1
      %p167 = por %p165, %p166
      %p168 = scmp.ne.s32.totalorder %s159, %s160
      %p169 = scmp.eq.s32.totalorder %s23, 0
      %p170 = por %p168, %p169
      %p171 = scmp.ne.s32.totalorder %s159, %s160
      %p172 = scmp.eq.s32.totalorder %s24, 1
      %p173 = por %p171, %p172
      %p175 = scmp.ne.s32.totalorder %s160, %s174
      %p176 = scmp.eq.s32.totalorder %s24, 0
      %p177 = por %p175, %p176
      %p178 = scmp.le.s32.totalorder 1, %s18
      %p179 = scmp.lt.s32.totalorder %s18, 3
      %p180 = pnand %p178, %p179
      %p181 = pneg %p180
      // Predicated region
      $region9: #{tpu_custom_call.1} parent=5 // pred_check
        _
      $region10: #{tpu_custom_call.1} parent=5 // pred_check_branch
        %183 = sbr.rel (%p180) target = $region12
      $region11: #{tpu_custom_call.1} parent=5 // pred_region
        %s184 = ssub.s32 %s18, 1
        // Predicated region
        $region13: #{tpu_custom_call.1} parent=11 // pred_check
          %p185 = pneg %p65
        $region14: #{tpu_custom_call.1} parent=11 // pred_check_branch
          %187 = sbr.rel (%p185) target = $region16
        $region15: #{tpu_custom_call.1} parent=11 // pred_region
          %s189 = ssub.s32 1024, 1024
          %190 = vsyncadd [#allocation8], %s189
          %s191 = sshll.u32 [#allocation7], 4
          %s192 = int_to_ptr.vmem [resolvable:$true] %s191
          %197 = dma.hbm_to_vmem [thread:$0]  %s1, 1024, %s192, [#allocation8], 64, 64, 4
        $region16: #{tpu_custom_call.1} parent=11 // pred_fallthru
          _
        // Predicated region
        $region17: #{tpu_custom_call.1} parent=11 // pred_check
          %p198 = pneg %p86
        $region18: #{tpu_custom_call.1} parent=11 // pred_check_branch
          %200 = sbr.rel (%p198) target = $region20
        $region19: #{tpu_custom_call.1} parent=11 // pred_region
          %s202 = ssub.s32 1024, 1024
          %203 = vsyncadd [#allocation8], %s202
          %s204 = sshll.u32 [#allocation9], 4
          %s205 = int_to_ptr.vmem [resolvable:$true] %s204
          %210 = dma.hbm_to_vmem [thread:$0]  %s2, 1024, %s205, [#allocation8], 64, 64, 4
        $region20: #{tpu_custom_call.1} parent=11 // pred_fallthru
          _
        // Predicated region
        $region21: #{tpu_custom_call.1} parent=11 // pred_check
          %p211 = pneg %p107
        $region22: #{tpu_custom_call.1} parent=11 // pred_check_branch
          %213 = sbr.rel (%p211) target = $region24
        $region23: #{tpu_custom_call.1} parent=11 // pred_region
          _
        $region24: #{tpu_custom_call.1} parent=11 // pred_fallthru
          _
        // Predicated region
        $region25: #{tpu_custom_call.1} parent=11 // pred_check
          %p214 = pneg %p128
        $region26: #{tpu_custom_call.1} parent=11 // pred_check_branch
          %216 = sbr.rel (%p214) target = $region28
        $region27: #{tpu_custom_call.1} parent=11 // pred_region
          %s218 = ssub.s32 1024, 1024
          %219 = vsyncadd [#allocation11], %s218
          %s220 = sshll.u32 [#allocation10], 4
          %s221 = int_to_ptr.vmem [resolvable:$true] %s220
          %226 = dma.hbm_to_vmem [thread:$0]  %s4, 1024, %s221, [#allocation11], 64, 64, 4
        $region28: #{tpu_custom_call.1} parent=11 // pred_fallthru
          _
        // Predicated region
        $region29: #{tpu_custom_call.1} parent=11 // pred_check
          %p227 = pneg %p149
        $region30: #{tpu_custom_call.1} parent=11 // pred_check_branch
          %229 = sbr.rel (%p227) target = $region32
        $region31: #{tpu_custom_call.1} parent=11 // pred_region
          _
        $region32: #{tpu_custom_call.1} parent=11 // pred_fallthru
          _
      $region12: #{tpu_custom_call.1} parent=5 // pred_fallthru
        _
      %p230 = scmp.lt.s32.totalorder %s18, 2
      // Predicated region
      $region33: #{tpu_custom_call.1} parent=5 // pred_check
        %p231 = pneg %p230
      $region34: #{tpu_custom_call.1} parent=5 // pred_check_branch
        %233 = sbr.rel (%p231) target = $region36
      $region35: #{tpu_custom_call.1} parent=5 // pred_region
        // Predicated region
        $region37: #{tpu_custom_call.1} parent=35 // pred_check
          %p234 = pneg %p38
        $region38: #{tpu_custom_call.1} parent=35 // pred_check_branch
          %236 = sbr.rel (%p234) target = $region40
        $region39: #{tpu_custom_call.1} parent=35 // pred_region
          %s237 = sand.u32 %s28, 1
          %s238 = scalar_lea.sflag [#allocation5], %s237
          %s239 = sand.u32 %s28, 1
          %s240 = smul.addr %s239, 16
          %s241 = scalar_lea.vmem [#allocation4], %s240
          %s242 = smul.u32 4, %s18
          %s244 = ssub.s32 256, 256
          %245 = vsyncadd %s238, %s244
          %s246 = smul.addr %s242, 64
          %s247 = scalar_lea.hbm %s0, %s246
          %s248 = sshll.u32 %s241, 4
          %s249 = int_to_ptr.vmem [resolvable:$true] %s248
          %254 = dma.hbm_to_vmem [thread:$0]  %s247, 256, %s249, %s238, 64, 64, 4
        $region40: #{tpu_custom_call.1} parent=35 // pred_fallthru
          _
      $region36: #{tpu_custom_call.1} parent=5 // pred_fallthru
        _
      %p255 = scmp.le.s32.totalorder 1, %s18
      %p256 = scmp.lt.s32.totalorder %s18, 3
      %p257 = pnand %p255, %p256
      %p258 = pneg %p257
      // Predicated region
      $region41: #{tpu_custom_call.1} parent=5 // pred_check
        _
      $region42: #{tpu_custom_call.1} parent=5 // pred_check_branch
        %260 = sbr.rel (%p257) target = $region44
      $region43: #{tpu_custom_call.1} parent=5 // pred_region
        %s261 = ssub.s32 %s18, 1
        %s262 = sand.u32 %s31, 1
        %s263 = scalar_lea.sflag [#allocation5], %s262
        %s264 = sand.u32 %s31, 1
        %s265 = smul.addr %s264, 16
        %s266 = scalar_lea.vmem [#allocation4], %s265
        // Predicated region
        $region45: #{tpu_custom_call.1} parent=43 // pred_check
          %p267 = pneg %p44
        $region46: #{tpu_custom_call.1} parent=43 // pred_check_branch
          %269 = sbr.rel (%p267) target = $region48
        $region47: #{tpu_custom_call.1} parent=43 // pred_region
          %270 = dma.done %s263, 256
        $region48: #{tpu_custom_call.1} parent=43 // pred_fallthru
          _
        // Predicated region
        $region49: #{tpu_custom_call.1} parent=43 // pred_check
          %p271 = pneg %p65
        $region50: #{tpu_custom_call.1} parent=43 // pred_check_branch
          %273 = sbr.rel (%p271) target = $region52
        $region51: #{tpu_custom_call.1} parent=43 // pred_region
          %274 = dma.done [#allocation8], 1024
        $region52: #{tpu_custom_call.1} parent=43 // pred_fallthru
          _
        // Predicated region
        $region53: #{tpu_custom_call.1} parent=43 // pred_check
          %p275 = pneg %p86
        $region54: #{tpu_custom_call.1} parent=43 // pred_check_branch
          %277 = sbr.rel (%p275) target = $region56
        $region55: #{tpu_custom_call.1} parent=43 // pred_region
          %278 = dma.done [#allocation8], 1024
        $region56: #{tpu_custom_call.1} parent=43 // pred_fallthru
          _
        // Predicated region
        $region57: #{tpu_custom_call.1} parent=43 // pred_check
          %p279 = pneg %p128
        $region58: #{tpu_custom_call.1} parent=43 // pred_check_branch
          %281 = sbr.rel (%p279) target = $region60
        $region59: #{tpu_custom_call.1} parent=43 // pred_region
          %282 = dma.done [#allocation11], 1024
        $region60: #{tpu_custom_call.1} parent=43 // pred_fallthru
          _
        %s283 = sand.u32 %s31, 1
        %s284 = scalar_lea.sflag [#allocation5], %s283
        %s285 = sand.u32 %s31, 1
        %s286 = smul.addr %s285, 16
        %s287 = scalar_lea.vmem [#allocation4], %s286
        %p288 = pneg %p44
        %p289 = pneg %p41
        %p290 = pneg %p65
        %p291 = pneg %p62
        %p292 = pneg %p86
        %p293 = pneg %p83
        %p294 = pneg %p107
        %p295 = pneg %p104
        %p296 = pneg %p128
        %p297 = pneg %p125
        %p298 = pneg %p149
        %p299 = pneg %p146
        %p300 = pneg %p170
        %p301 = pneg %p167
        %s302 = smul.u32 4, %s23
        %p304 = scmp.eq.s32.totalorder %s23, 0
        // Predicated region
        $region61: #{tpu_custom_call.1} parent=43 // pred_check
          %p305 = pneg %p304
        $region62: #{tpu_custom_call.1} parent=43 // pred_check_branch
          %307 = sbr.rel (%p305) target = $region64
        $region63: #{tpu_custom_call.1} parent=43 // pred_region
          %308 = vst [vmem:[#allocation2] sm:$0xff] 0.0
        $region64: #{tpu_custom_call.1} parent=43 // pred_fallthru
          _
        %v309 = vld [vmem:[%s266] sm:$0xf]
        %v310 = vld [vmem:[%s266 + $0x4] sm:$0xf]
        %v311 = vld [vmem:[%s266 + $0x8] sm:$0xf]
        %v312 = vld [vmem:[%s266 + $0xc] sm:$0xf]
        %v313 = vld [vmem:[#allocation7] sm:$0xf]
        %v314 = vld [vmem:[#allocation7 + $0x4] sm:$0xf]
        %v315 = vld [vmem:[#allocation7 + $0x8] sm:$0xf]
        %v316 = vld [vmem:[#allocation7 + $0xc] sm:$0xf]
        %v317 = vld [vmem:[#allocation7 + $0x10] sm:$0xf]
        %v318 = vld [vmem:[#allocation7 + $0x14] sm:$0xf]
        %v319 = vld [vmem:[#allocation7 + $0x18] sm:$0xf]
        %v320 = vld [vmem:[#allocation7 + $0x1c] sm:$0xf]
        %v321 = vld [vmem:[#allocation7 + $0x20] sm:$0xf]
        %v322 = vld [vmem:[#allocation7 + $0x24] sm:$0xf]
        %v323 = vld [vmem:[#allocation7 + $0x28] sm:$0xf]
        %v324 = vld [vmem:[#allocation7 + $0x2c] sm:$0xf]
        %v325 = vld [vmem:[#allocation7 + $0x30] sm:$0xf]
        %v326 = vld [vmem:[#allocation7 + $0x34] sm:$0xf]
        %v327 = vld [vmem:[#allocation7 + $0x38] sm:$0xf]
        %v328 = vld [vmem:[#allocation7 + $0x3c] sm:$0xf]
        %v329 = vld [vmem:[%s3] sm:$0x1]
        %v331 = vlaneseq
        %v332 = vshrl.u32 %v331, 7
        %v333 = vsub.s32 0, %v332
        %v334 = vrot.slane %v329, %v333
        %v340 = vunpack.c.l.b16 %v309
        %v341 = vunpack.c.l.b16 %v310
        %v342 = vunpack.c.l.b16 %v311
        %v343 = vunpack.c.l.b16 %v312
        %v344 = vpack.c.b16 %v341, %v340
        %v345 = vpack.c.b16 %v343, %v342
        %v364 = vunpack.c.l.b16 %v313
        %v365 = vunpack.c.l.b16 %v314
        %v366 = vunpack.c.l.b16 %v315
        %v367 = vunpack.c.l.b16 %v316
        %v368 = vunpack.c.l.b16 %v317
        %v369 = vunpack.c.l.b16 %v318
        %v370 = vunpack.c.l.b16 %v319
        %v371 = vunpack.c.l.b16 %v320
        %v372 = vunpack.c.l.b16 %v321
        %v373 = vunpack.c.l.b16 %v322
        %v374 = vunpack.c.l.b16 %v323
        %v375 = vunpack.c.l.b16 %v324
        %v376 = vunpack.c.l.b16 %v325
        %v377 = vunpack.c.l.b16 %v326
        %v378 = vunpack.c.l.b16 %v327
        %v379 = vunpack.c.l.b16 %v328
        %v380 = vpack.c.b16 %v365, %v364
        %v381 = vpack.c.b16 %v367, %v366
        %v382 = vpack.c.b16 %v369, %v368
        %v383 = vpack.c.b16 %v371, %v370
        %v384 = vpack.c.b16 %v373, %v372
        %v385 = vpack.c.b16 %v375, %v374
        %v386 = vpack.c.b16 %v377, %v376
        %v387 = vpack.c.b16 %v379, %v378
        %396 = vmatprep.subr.bf16.mxu0 0
        %397 = vmatpush1.bf16.msra.mxu0 %v380
        %398 = vmatprep.subr.bf16.mxu0 0
        %399 = vmatpush1.bf16.msra.mxu0 %v381
        %400 = vmatprep.subr.bf16.mxu0 0
        %401 = vmatpush1.bf16.msra.mxu0 %v382
        %402 = vmatprep.subr.bf16.mxu0 0
        %403 = vmatpush1.bf16.msra.mxu0 %v383
        %404 = vmatprep.subr.bf16.mxu0 0
        %405 = vmatpush1.bf16.msra.mxu0 %v384
        %406 = vmatprep.subr.bf16.mxu0 0
        %407 = vmatpush1.bf16.msra.mxu0 %v385
        %408 = vmatprep.subr.bf16.mxu0 0
        %409 = vmatpush1.bf16.msra.mxu0 %v386
        %410 = vmatprep.subr.bf16.mxu0 0
        %411 = vmatpush1.bf16.msra.mxu0 %v387
        %412 = vmatprep.subr.bf16.mxu0 0
        %413 = vmatpush1.bf16.msra.mxu0 0
        %414 = vmatprep.subr.bf16.mxu0 0
        %415 = vmatpush1.bf16.msra.mxu0 0
        %416 = vmatprep.subr.bf16.mxu0 0
        %417 = vmatpush1.bf16.msra.mxu0 0
        %418 = vmatprep.subr.bf16.mxu0 0
        %419 = vmatpush1.bf16.msra.mxu0 0
        %420 = vmatprep.subr.bf16.mxu0 0
        %421 = vmatpush1.bf16.msra.mxu0 0
        %422 = vmatprep.subr.bf16.mxu0 0
        %423 = vmatpush1.bf16.msra.mxu0 0
        %424 = vmatprep.subr.bf16.mxu0 0
        %425 = vmatpush1.bf16.msra.mxu0 0
        %426 = vmatprep.subr.bf16.mxu0 0
        %427 = vmatpush1.bf16.msra.mxu0 0
        %428 = vmatprep.mubr.bf16.mxu0 0
        %429 = vmatmul.mubr.bf16.gmra.mrb[0].mxu0 %v344
        %v430 = vpop.f32.mrb[0].mxu0
        %v431 = vadd.f32 %v334, %v430
        %v432 = vpop.f32.mrb[0].mxu0
        %v433 = vpop.f32.mrb[0].mxu0
        %v434 = vadd.f32 %v334, %v433
        %v435 = vpop.f32.mrb[0].mxu0
        %436 = vmatprep.mubr.bf16.mxu0 0
        %437 = vmatmul.mubr.bf16.gmra.mrb[0].mxu0 %v345
        %v438 = vpop.f32.mrb[0].mxu0
        %v439 = vadd.f32 %v334, %v438
        %v440 = vpop.f32.mrb[0].mxu0
        %v441 = vpop.f32.mrb[0].mxu0
        %v442 = vadd.f32 %v334, %v441
        %v443 = vpop.f32.mrb[0].mxu0
        %444 = vdwg.mxu0
        %445 = vst [vmem:[#allocation3] sm:$0xff] %v431
        %446 = vst [vmem:[#allocation3 + $0x8] sm:$0xff] %v434
        %447 = vst [vmem:[#allocation3 + $0x10] sm:$0xff] %v439
        %448 = vst [vmem:[#allocation3 + $0x18] sm:$0xff] %v442
        %v449 = vld [vmem:[#allocation9] sm:$0xf]
        %v450 = vld [vmem:[#allocation9 + $0x4] sm:$0xf]
        %v451 = vld [vmem:[#allocation9 + $0x8] sm:$0xf]
        %v452 = vld [vmem:[#allocation9 + $0xc] sm:$0xf]
        %v453 = vld [vmem:[#allocation9 + $0x10] sm:$0xf]
        %v454 = vld [vmem:[#allocation9 + $0x14] sm:$0xf]
        %v455 = vld [vmem:[#allocation9 + $0x18] sm:$0xf]
        %v456 = vld [vmem:[#allocation9 + $0x1c] sm:$0xf]
        %v457 = vld [vmem:[#allocation9 + $0x20] sm:$0xf]
        %v458 = vld [vmem:[#allocation9 + $0x24] sm:$0xf]
        %v459 = vld [vmem:[#allocation9 + $0x28] sm:$0xf]
        %v460 = vld [vmem:[#allocation9 + $0x2c] sm:$0xf]
        %v461 = vld [vmem:[#allocation9 + $0x30] sm:$0xf]
        %v462 = vld [vmem:[#allocation9 + $0x34] sm:$0xf]
        %v463 = vld [vmem:[#allocation9 + $0x38] sm:$0xf]
        %v464 = vld [vmem:[#allocation9 + $0x3c] sm:$0xf]
        %v465 = vld [vmem:[#allocation2] sm:$0xff]
        %v466 = vld [vmem:[#allocation3] sm:$0xff]
        %v467 = vpack.c.bf16 %v465, %v465
        %v484 = vunpack.c.l.b16 %v449
        %v485 = vunpack.c.l.b16 %v450
        %v486 = vunpack.c.l.b16 %v451
        %v487 = vunpack.c.l.b16 %v452
        %v488 = vunpack.c.l.b16 %v453
        %v489 = vunpack.c.l.b16 %v454
        %v490 = vunpack.c.l.b16 %v455
        %v491 = vunpack.c.l.b16 %v456
        %v492 = vunpack.c.l.b16 %v457
        %v493 = vunpack.c.l.b16 %v458
        %v494 = vunpack.c.l.b16 %v459
        %v495 = vunpack.c.l.b16 %v460
        %v496 = vunpack.c.l.b16 %v461
        %v497 = vunpack.c.l.b16 %v462
        %v498 = vunpack.c.l.b16 %v463
        %v499 = vunpack.c.l.b16 %v464
        %v500 = vpack.c.b16 %v485, %v484
        %v501 = vpack.c.b16 %v487, %v486
        %v502 = vpack.c.b16 %v489, %v488
        %v503 = vpack.c.b16 %v491, %v490
        %v504 = vpack.c.b16 %v493, %v492
        %v505 = vpack.c.b16 %v495, %v494
        %v506 = vpack.c.b16 %v497, %v496
        %v507 = vpack.c.b16 %v499, %v498
        %516 = vmatprep.subr.bf16.mxu0 0
        %517 = vmatpush1.bf16.msra.mxu0 %v500
        %518 = vmatprep.subr.bf16.mxu0 0
        %519 = vmatpush1.bf16.msra.mxu0 %v501
        %520 = vmatprep.subr.bf16.mxu0 0
        %521 = vmatpush1.bf16.msra.mxu0 %v502
        %522 = vmatprep.subr.bf16.mxu0 0
        %523 = vmatpush1.bf16.msra.mxu0 %v503
        %524 = vmatprep.subr.bf16.mxu0 0
        %525 = vmatpush1.bf16.msra.mxu0 %v504
        %526 = vmatprep.subr.bf16.mxu0 0
        %527 = vmatpush1.bf16.msra.mxu0 %v505
        %528 = vmatprep.subr.bf16.mxu0 0
        %529 = vmatpush1.bf16.msra.mxu0 %v506
        %530 = vmatprep.subr.bf16.mxu0 0
        %531 = vmatpush1.bf16.msra.mxu0 %v507
        %532 = vmatprep.subr.bf16.mxu0 0
        %533 = vmatpush1.bf16.msra.mxu0 0
        %534 = vmatprep.subr.bf16.mxu0 0
        %535 = vmatpush1.bf16.msra.mxu0 0
        %536 = vmatprep.subr.bf16.mxu0 0
        %537 = vmatpush1.bf16.msra.mxu0 0
        %538 = vmatprep.subr.bf16.mxu0 0
        %539 = vmatpush1.bf16.msra.mxu0 0
        %540 = vmatprep.subr.bf16.mxu0 0
        %541 = vmatpush1.bf16.msra.mxu0 0
        %542 = vmatprep.subr.bf16.mxu0 0
        %543 = vmatpush1.bf16.msra.mxu0 0
        %544 = vmatprep.subr.bf16.mxu0 0
        %545 = vmatpush1.bf16.msra.mxu0 0
        %546 = vmatprep.subr.bf16.mxu0 0
        %547 = vmatpush1.bf16.msra.mxu0 0
        %548 = vmatprep.mubr.bf16.mxu0 0
        %549 = vmatmul.mubr.bf16.gmra.mrb[0].mxu0 %v467
        %v550 = vpop.f32.mrb[0].mxu0
        %v551 = vadd.f32 0.0, %v550
        %v552 = vpop.f32.mrb[0].mxu0
        %v553 = vpop.f32.mrb[0].mxu0
        %v554 = vpop.f32.mrb[0].mxu0
        %555 = vdwg.mxu0
        %v556 = vadd.f32 %v466, %v551
        %v557 = vtanh.pop %v556
        %s558 = scalar_lea.vmem [#allocation3], 8
        %v559 = vld [vmem:[%s558] sm:$0xff]
        %v560 = vpack.c.bf16 %v557, %v557
        %561 = vmatprep.subr.bf16.mxu0 0
        %562 = vmatpush1.bf16.msra.mxu0 %v500
        %563 = vmatprep.subr.bf16.mxu0 0
        %564 = vmatpush1.bf16.msra.mxu0 %v501
        %565 = vmatprep.subr.bf16.mxu0 0
        %566 = vmatpush1.bf16.msra.mxu0 %v502
        %567 = vmatprep.subr.bf16.mxu0 0
        %568 = vmatpush1.bf16.msra.mxu0 %v503
        %569 = vmatprep.subr.bf16.mxu0 0
        %570 = vmatpush1.bf16.msra.mxu0 %v504
        %571 = vmatprep.subr.bf16.mxu0 0
        %572 = vmatpush1.bf16.msra.mxu0 %v505
        %573 = vmatprep.subr.bf16.mxu0 0
        %574 = vmatpush1.bf16.msra.mxu0 %v506
        %575 = vmatprep.subr.bf16.mxu0 0
        %576 = vmatpush1.bf16.msra.mxu0 %v507
        %577 = vmatprep.subr.bf16.mxu0 0
        %578 = vmatpush1.bf16.msra.mxu0 0
        %579 = vmatprep.subr.bf16.mxu0 0
        %580 = vmatpush1.bf16.msra.mxu0 0
        %581 = vmatprep.subr.bf16.mxu0 0
        %582 = vmatpush1.bf16.msra.mxu0 0
        %583 = vmatprep.subr.bf16.mxu0 0
        %584 = vmatpush1.bf16.msra.mxu0 0
        %585 = vmatprep.subr.bf16.mxu0 0
        %586 = vmatpush1.bf16.msra.mxu0 0
        %587 = vmatprep.subr.bf16.mxu0 0
        %588 = vmatpush1.bf16.msra.mxu0 0
        %589 = vmatprep.subr.bf16.mxu0 0
        %590 = vmatpush1.bf16.msra.mxu0 0
        %591 = vmatprep.subr.bf16.mxu0 0
        %592 = vmatpush1.bf16.msra.mxu0 0
        %593 = vmatprep.mubr.bf16.mxu0 0
        %594 = vmatmul.mubr.bf16.gmra.mrb[0].mxu0 %v560
        %v595 = vpop.f32.mrb[0].mxu0
        %v596 = vadd.f32 0.0, %v595
        %v597 = vpop.f32.mrb[0].mxu0
        %v598 = vpop.f32.mrb[0].mxu0
        %v599 = vpop.f32.mrb[0].mxu0
        %600 = vdwg.mxu0
        %v601 = vadd.f32 %v559, %v596
        %v602 = vtanh.pop %v601
        %s603 = scalar_lea.vmem [#allocation3], 16
        %v604 = vld [vmem:[%s603] sm:$0xff]
        %v605 = vpack.c.bf16 %v602, %v602
        %606 = vmatprep.subr.bf16.mxu0 0
        %607 = vmatpush1.bf16.msra.mxu0 %v500
        %608 = vmatprep.subr.bf16.mxu0 0
        %609 = vmatpush1.bf16.msra.mxu0 %v501
        %610 = vmatprep.subr.bf16.mxu0 0
        %611 = vmatpush1.bf16.msra.mxu0 %v502
        %612 = vmatprep.subr.bf16.mxu0 0
        %613 = vmatpush1.bf16.msra.mxu0 %v503
        %614 = vmatprep.subr.bf16.mxu0 0
        %615 = vmatpush1.bf16.msra.mxu0 %v504
        %616 = vmatprep.subr.bf16.mxu0 0
        %617 = vmatpush1.bf16.msra.mxu0 %v505
        %618 = vmatprep.subr.bf16.mxu0 0
        %619 = vmatpush1.bf16.msra.mxu0 %v506
        %620 = vmatprep.subr.bf16.mxu0 0
        %621 = vmatpush1.bf16.msra.mxu0 %v507
        %622 = vmatprep.subr.bf16.mxu0 0
        %623 = vmatpush1.bf16.msra.mxu0 0
        %624 = vmatprep.subr.bf16.mxu0 0
        %625 = vmatpush1.bf16.msra.mxu0 0
        %626 = vmatprep.subr.bf16.mxu0 0
        %627 = vmatpush1.bf16.msra.mxu0 0
        %628 = vmatprep.subr.bf16.mxu0 0
        %629 = vmatpush1.bf16.msra.mxu0 0
        %630 = vmatprep.subr.bf16.mxu0 0
        %631 = vmatpush1.bf16.msra.mxu0 0
        %632 = vmatprep.subr.bf16.mxu0 0
        %633 = vmatpush1.bf16.msra.mxu0 0
        %634 = vmatprep.subr.bf16.mxu0 0
        %635 = vmatpush1.bf16.msra.mxu0 0
        %636 = vmatprep.subr.bf16.mxu0 0
        %637 = vmatpush1.bf16.msra.mxu0 0
        %638 = vmatprep.mubr.bf16.mxu0 0
        %639 = vmatmul.mubr.bf16.gmra.mrb[0].mxu0 %v605
        %v640 = vpop.f32.mrb[0].mxu0
        %v641 = vadd.f32 0.0, %v640
        %v642 = vpop.f32.mrb[0].mxu0
        %v643 = vpop.f32.mrb[0].mxu0
        %v644 = vpop.f32.mrb[0].mxu0
        %645 = vdwg.mxu0
        %v646 = vadd.f32 %v604, %v641
        %v647 = vtanh.pop %v646
        %s648 = scalar_lea.vmem [#allocation3], 24
        %v649 = vld [vmem:[%s648] sm:$0xff]
        %v650 = vpack.c.bf16 %v647, %v647
        %651 = vmatprep.subr.bf16.mxu0 0
        %652 = vmatpush1.bf16.msra.mxu0 %v500
        %653 = vmatprep.subr.bf16.mxu0 0
        %654 = vmatpush1.bf16.msra.mxu0 %v501
        %655 = vmatprep.subr.bf16.mxu0 0
        %656 = vmatpush1.bf16.msra.mxu0 %v502
        %657 = vmatprep.subr.bf16.mxu0 0
        %658 = vmatpush1.bf16.msra.mxu0 %v503
        %659 = vmatprep.subr.bf16.mxu0 0
        %660 = vmatpush1.bf16.msra.mxu0 %v504
        %661 = vmatprep.subr.bf16.mxu0 0
        %662 = vmatpush1.bf16.msra.mxu0 %v505
        %663 = vmatprep.subr.bf16.mxu0 0
        %664 = vmatpush1.bf16.msra.mxu0 %v506
        %665 = vmatprep.subr.bf16.mxu0 0
        %666 = vmatpush1.bf16.msra.mxu0 %v507
        %667 = vmatprep.subr.bf16.mxu0 0
        %668 = vmatpush1.bf16.msra.mxu0 0
        %669 = vmatprep.subr.bf16.mxu0 0
        %670 = vmatpush1.bf16.msra.mxu0 0
        %671 = vmatprep.subr.bf16.mxu0 0
        %672 = vmatpush1.bf16.msra.mxu0 0
        %673 = vmatprep.subr.bf16.mxu0 0
        %674 = vmatpush1.bf16.msra.mxu0 0
        %675 = vmatprep.subr.bf16.mxu0 0
        %676 = vmatpush1.bf16.msra.mxu0 0
        %677 = vmatprep.subr.bf16.mxu0 0
        %678 = vmatpush1.bf16.msra.mxu0 0
        %679 = vmatprep.subr.bf16.mxu0 0
        %680 = vmatpush1.bf16.msra.mxu0 0
        %681 = vmatprep.subr.bf16.mxu0 0
        %682 = vmatpush1.bf16.msra.mxu0 0
        %683 = vmatprep.mubr.bf16.mxu0 0
        %684 = vmatmul.mubr.bf16.gmra.mrb[0].mxu0 %v650
        %v685 = vpop.f32.mrb[0].mxu0
        %v686 = vadd.f32 0.0, %v685
        %v687 = vpop.f32.mrb[0].mxu0
        %v688 = vpop.f32.mrb[0].mxu0
        %v689 = vpop.f32.mrb[0].mxu0
        %690 = vdwg.mxu0
        %v691 = vadd.f32 %v649, %v686
        %v692 = vtanh.pop %v691
        %693 = vst [vmem:[#allocation2] sm:$0xff] %v692
        %p694 = scmp.eq.s32.totalorder %s23, 1
        // Predicated region
        $region65: #{tpu_custom_call.1} parent=43 // pred_check
          %p695 = pneg %p694
        $region66: #{tpu_custom_call.1} parent=43 // pred_check_branch
          %697 = sbr.rel (%p695) target = $region68
        $region67: #{tpu_custom_call.1} parent=43 // pred_region
          %v698 = vld [vmem:[#allocation2] sm:$0xff]
          %v699 = vpack.c.bf16 %v698, %v698
          %v700 = vld [vmem:[#allocation10] sm:$0xf]
          %v701 = vld [vmem:[#allocation10 + $0x4] sm:$0xf]
          %v702 = vld [vmem:[#allocation10 + $0x8] sm:$0xf]
          %v703 = vld [vmem:[#allocation10 + $0xc] sm:$0xf]
          %v704 = vld [vmem:[#allocation10 + $0x10] sm:$0xf]
          %v705 = vld [vmem:[#allocation10 + $0x14] sm:$0xf]
          %v706 = vld [vmem:[#allocation10 + $0x18] sm:$0xf]
          %v707 = vld [vmem:[#allocation10 + $0x1c] sm:$0xf]
          %v708 = vld [vmem:[#allocation10 + $0x20] sm:$0xf]
          %v709 = vld [vmem:[#allocation10 + $0x24] sm:$0xf]
          %v710 = vld [vmem:[#allocation10 + $0x28] sm:$0xf]
          %v711 = vld [vmem:[#allocation10 + $0x2c] sm:$0xf]
          %v712 = vld [vmem:[#allocation10 + $0x30] sm:$0xf]
          %v713 = vld [vmem:[#allocation10 + $0x34] sm:$0xf]
          %v714 = vld [vmem:[#allocation10 + $0x38] sm:$0xf]
          %v715 = vld [vmem:[#allocation10 + $0x3c] sm:$0xf]
          %v716 = vld [vmem:[%s5] sm:$0x1]
          %v718 = vlaneseq
          %v719 = vshrl.u32 %v718, 7
          %v720 = vsub.s32 0, %v719
          %v721 = vrot.slane %v716, %v720
          %v739 = vunpack.c.l.b16 %v700
          %v740 = vunpack.c.l.b16 %v701
          %v741 = vunpack.c.l.b16 %v702
          %v742 = vunpack.c.l.b16 %v703
          %v743 = vunpack.c.l.b16 %v704
          %v744 = vunpack.c.l.b16 %v705
          %v745 = vunpack.c.l.b16 %v706
          %v746 = vunpack.c.l.b16 %v707
          %v747 = vunpack.c.l.b16 %v708
          %v748 = vunpack.c.l.b16 %v709
          %v749 = vunpack.c.l.b16 %v710
          %v750 = vunpack.c.l.b16 %v711
          %v751 = vunpack.c.l.b16 %v712
          %v752 = vunpack.c.l.b16 %v713
          %v753 = vunpack.c.l.b16 %v714
          %v754 = vunpack.c.l.b16 %v715
          %v755 = vpack.c.b16 %v740, %v739
          %v756 = vpack.c.b16 %v742, %v741
          %v757 = vpack.c.b16 %v744, %v743
          %v758 = vpack.c.b16 %v746, %v745
          %v759 = vpack.c.b16 %v748, %v747
          %v760 = vpack.c.b16 %v750, %v749
          %v761 = vpack.c.b16 %v752, %v751
          %v762 = vpack.c.b16 %v754, %v753
          %771 = vmatprep.subr.bf16.mxu0 0
          %772 = vmatpush1.bf16.msra.mxu0 %v755
          %773 = vmatprep.subr.bf16.mxu0 0
          %774 = vmatpush1.bf16.msra.mxu0 %v756
          %775 = vmatprep.subr.bf16.mxu0 0
          %776 = vmatpush1.bf16.msra.mxu0 %v757
          %777 = vmatprep.subr.bf16.mxu0 0
          %778 = vmatpush1.bf16.msra.mxu0 %v758
          %779 = vmatprep.subr.bf16.mxu0 0
          %780 = vmatpush1.bf16.msra.mxu0 %v759
          %781 = vmatprep.subr.bf16.mxu0 0
          %782 = vmatpush1.bf16.msra.mxu0 %v760
          %783 = vmatprep.subr.bf16.mxu0 0
          %784 = vmatpush1.bf16.msra.mxu0 %v761
          %785 = vmatprep.subr.bf16.mxu0 0
          %786 = vmatpush1.bf16.msra.mxu0 %v762
          %787 = vmatprep.subr.bf16.mxu0 0
          %788 = vmatpush1.bf16.msra.mxu0 0
          %789 = vmatprep.subr.bf16.mxu0 0
          %790 = vmatpush1.bf16.msra.mxu0 0
          %791 = vmatprep.subr.bf16.mxu0 0
          %792 = vmatpush1.bf16.msra.mxu0 0
          %793 = vmatprep.subr.bf16.mxu0 0
          %794 = vmatpush1.bf16.msra.mxu0 0
          %795 = vmatprep.subr.bf16.mxu0 0
          %796 = vmatpush1.bf16.msra.mxu0 0
          %797 = vmatprep.subr.bf16.mxu0 0
          %798 = vmatpush1.bf16.msra.mxu0 0
          %799 = vmatprep.subr.bf16.mxu0 0
          %800 = vmatpush1.bf16.msra.mxu0 0
          %801 = vmatprep.subr.bf16.mxu0 0
          %802 = vmatpush1.bf16.msra.mxu0 0
          %803 = vmatprep.mubr.bf16.mxu0 0
          %804 = vmatmul.mubr.bf16.gmra.mrb[0].mxu0 %v699
          %v805 = vpop.f32.mrb[0].mxu0
          %v806 = vadd.f32 %v721, %v805
          %v807 = vpop.f32.mrb[0].mxu0
          %v808 = vpop.f32.mrb[0].mxu0
          %v809 = vpop.f32.mrb[0].mxu0
          %810 = vdwg.mxu0
          %811 = vst [vmem:[#allocation12] sm:$0xff] %v806
        $region68: #{tpu_custom_call.1} parent=43 // pred_fallthru
          _
        // Predicated region
        $region69: #{tpu_custom_call.1} parent=43 // pred_check
          %p812 = pneg %p167
        $region70: #{tpu_custom_call.1} parent=43 // pred_check_branch
          %814 = sbr.rel (%p812) target = $region72
        $region71: #{tpu_custom_call.1} parent=43 // pred_region
          %s816 = ssub.s32 128, 128
          %817 = vsyncadd [#allocation6], %s816
          %s819 = sshll.u32 [#allocation12], 4
          %s820 = int_to_ptr.vmem [resolvable:$true] %s819
          %822 = dma.vmem_to_hbm [thread:$0]  %s820, 128, %s6, [#allocation6]
        $region72: #{tpu_custom_call.1} parent=43 // pred_fallthru
          _
        // Predicated region
        $region73: #{tpu_custom_call.1} parent=43 // pred_check
          %p823 = pneg %p167
        $region74: #{tpu_custom_call.1} parent=43 // pred_check_branch
          %825 = sbr.rel (%p823) target = $region76
        $region75: #{tpu_custom_call.1} parent=43 // pred_region
          %826 = dma.done [#allocation6], 128
        $region76: #{tpu_custom_call.1} parent=43 // pred_fallthru
          _
      $region44: #{tpu_custom_call.1} parent=5 // pred_fallthru
        _
      %p827 = scmp.le.s32.totalorder 2, %s18
      // Predicated region
      $region77: #{tpu_custom_call.1} parent=5 // pred_check
        %p828 = pneg %p827
      $region78: #{tpu_custom_call.1} parent=5 // pred_check_branch
        %830 = sbr.rel (%p828) target = $region80
      $region79: #{tpu_custom_call.1} parent=5 // pred_region
        %s831 = ssub.s32 %s18, 2
      $region80: #{tpu_custom_call.1} parent=5 // pred_fallthru
        _
    $region6: #{tpu_custom_call.1} parent=1 // loop_footer
      %s22 = sadd.s32 1, %s18
    $region7: #{tpu_custom_call.1} parent=1 // loop_footer_branch
      %17 = sbr.rel target = $region3
    $region8: #{tpu_custom_call.1} parent=1 // loop_exit
      _
    %832 = vsyncpa [#allocation5], 1
    %s833 = scalar_lea.sflag [#allocation5], 1
    %834 = vsyncpa %s833, 1
    %835 = vsyncpa [#allocation8], 1
    %836 = vsyncpa [#allocation11], 1
    %837 = vsyncpa [#allocation6], 1
    %s838 = scalar_lea.sflag [#allocation6], 1
    %839 = vsyncpa %s838, 1

</llo_original>
